<compile_context>
chip_gen: v6e
topology: v6e:2x2x1
jax: 0.10.0
libtpu: 0.0.40
codegen_flags: <defaults>
</compile_context>

<pallas_src>
import jax
import jax.numpy as jnp
from jax.experimental import pallas as pl
from jax.experimental.pallas import tpu as pltpu

_MIB = 1024 * 1024


# ----------------------------------------------------------------------------
# helpers
# ----------------------------------------------------------------------------
def _round_up(x, m):
    return ((x + m - 1) // m) * m


def _pad_to(a, shape, dtype):
    a = jnp.asarray(a).astype(dtype)
    pads = [(0, t - s) for s, t in zip(a.shape, shape)]
    return jnp.pad(a, pads)


def _vmem_capacity_bytes():
    """VMEM capacity of the attached TPU; conservative 64 MiB fallback."""
    try:
        info = pltpu.get_tpu_info()
        for name in ("vmem_capacity_bytes", "vmem_size_bytes", "vmem_bytes"):
            v = getattr(info, name, None)
            if v:
                return int(v)
    except Exception:
        pass
    return 64 * _MIB


def _vmem_bytes_1d(tm, k1p, k2p, npad, x_bytes):
    # Pallas double-buffers every input / output block; h scratch is single.
    return (2 * tm * k1p * x_bytes        # x row tile
            + 2 * k1p * k2p * 2           # W1 (bf16)
            + 2 * k2p * 4                 # b1
            + 2 * k2p * npad * 2          # W2 fully resident (bf16)
            + 2 * npad * 4                # b2
            + 2 * tm * npad * 4           # output tile (f32)
            + tm * k2p * 2)               # h scratch (bf16)


def _vmem_bytes_2d(tm, tn, k1p, k2p, x_bytes):
    return (2 * tm * k1p * x_bytes
            + 2 * k1p * k2p * 2
            + 2 * k2p * 4
            + 2 * k2p * tn * 2
            + 2 * tn * 4
            + 2 * tm * tn * 4
            + tm * k2p * 2)


def _largest_tile_divisor(total, tile_max, quantum=128):
    """Largest multiple of `quantum` dividing `total` that is <= tile_max."""
    best = quantum
    for f in range(1, total // quantum + 1):
        cand = quantum * f
        if total % cand == 0 and cand <= tile_max:
            best = cand
    return best


# ----------------------------------------------------------------------------
# kernels
# ----------------------------------------------------------------------------
def _pred_kernel_1d(x_ref, w1_ref, b1_ref, w2_ref, b2_ref, o_ref, h_ref):
    # 1-D grid over row tiles; W2 fully resident -> fc1 runs exactly once / tile.
    xb = x_ref[...].astype(jnp.bfloat16)                       # cast on-chip
    h = jnp.dot(xb, w1_ref[...], preferred_element_type=jnp.float32)
    h = jnp.maximum(h + b1_ref[...], 0.0)                      # bias + ReLU (f32)
    h_ref[...] = h.astype(jnp.bfloat16)                        # stage in VMEM
    o = jnp.dot(h_ref[...], w2_ref[...], preferred_element_type=jnp.float32)
    o_ref[...] = (o + b2_ref[...]).astype(o_ref.dtype)


def _pred_kernel_2d(x_ref, w1_ref, b1_ref, w2_ref, b2_ref, o_ref, h_ref):
    # 2-D grid (row tile i, column tile j).  fc1 is computed only on the first
    # column tile and carried across j in the persistent h_ref scratch
    # (requires j to be a sequential / "arbitrary" grid axis).
    @pl.when(pl.program_id(1) == 0)
    def _():
        xb = x_ref[...].astype(jnp.bfloat16)
        h = jnp.dot(xb, w1_ref[...], preferred_element_type=jnp.float32)
        h = jnp.maximum(h + b1_ref[...], 0.0)
        h_ref[...] = h.astype(jnp.bfloat16)

    o = jnp.dot(h_ref[...], w2_ref[...], preferred_element_type=jnp.float32)
    o_ref[...] = (o + b2_ref[...]).astype(o_ref.dtype)


# ----------------------------------------------------------------------------
# parameter prep (one-time, hoisted out of the per-call path)
# ----------------------------------------------------------------------------
def prepare_params(w1, b1, w2, b2, *, lane=128):
    """w1: (dim2, dim1), b1: (dim2,), w2: (n_nodes, dim2), b2: (n_nodes,).

    Returns bf16 weights transposed to (in, out), zero-padded to multiples of
    128 on contraction/output dims; biases as f32 rows (1, padded_out).
    """
    dim2, dim1 = w1.shape
    n_nodes = w2.shape[0]
    k1p = _round_up(dim1, lane)
    k2p = _round_up(dim2, lane)
    npad = _round_up(n_nodes, lane)

    w1_t = _pad_to(jnp.asarray(w1, jnp.float32).T, (k1p, k2p), jnp.bfloat16)
    w2_t = _pad_to(jnp.asarray(w2, jnp.float32).T, (k2p, npad), jnp.bfloat16)
    b1_p = _pad_to(jnp.asarray(b1, jnp.float32).reshape(1, dim2), (1, k2p), jnp.float32)
    b2_p = _pad_to(jnp.asarray(b2, jnp.float32).reshape(1, n_nodes), (1, npad), jnp.float32)

    meta = dict(dim1=dim1, dim2=dim2, n_nodes=n_nodes, k1p=k1p, k2p=k2p, npad=npad)
    return (w1_t, b1_p, w2_t, b2_p), meta


# ----------------------------------------------------------------------------
# forward
# ----------------------------------------------------------------------------
def prediction_layer(x, params, meta, *, force_two_d=False, tile_override=None):
    """x: (n_nodes, dim1) f32.  Returns (n_nodes, n_nodes) f32."""
    w1_t, b1_p, w2_t, b2_p = params
    m, dim1 = x.shape
    n_nodes = meta["n_nodes"]
    k1p, k2p, npad = meta["k1p"], meta["k2p"], meta["npad"]

    if dim1 != meta["dim1"]:
        raise ValueError(f"x feature dim {dim1} != fc1 in_features {meta['dim1']}")
    if m != n_nodes:
        raise ValueError(
            f"reshape([n_nodes, n_nodes]) requires x.shape[0] == n_nodes "
            f"(got {m} vs {n_nodes}), matching the PyTorch module's contract")

    # --- generation-aware VMEM budget / tile defaults -----------------------
    vmem = _vmem_capacity_bytes()
    if vmem >= 96 * _MIB:                 # v5e / v6e (128 MiB VMEM)
        vmem_limit, budget = 100 * _MIB, 90 * _MIB
        tm_max, tn_max = 512, 1024
        small_vmem = False
    else:                                 # v7x (64 MiB) or unknown -> conservative
        vmem_limit, budget = 48 * _MIB, 42 * _MIB
        tm_max, tn_max = 256, 512
        small_vmem = True
    if tile_override is not None:
        tm_max, tn_max = tile_override

    x_bytes = 4  # plan the footprint for an f32 x tile (worst case)

    # Row tile: 16-aligned (one bf16 vreg = [16, 128] sublanes x lanes).
    tm = min(tm_max, _round_up(m, 16))

    # --- try the 1-D path: W2 fully resident, grid over row tiles only ------
    use_1d = not force_two_d
    if use_1d:
        tm_1d = tm
        while tm_1d > 16 and _vmem_bytes_1d(tm_1d, k1p, k2p, npad, x_bytes) > budget:
            tm_1d = max(16, (tm_1d // 2) // 16 * 16)
        use_1d = _vmem_bytes_1d(tm_1d, k1p, k2p, npad, x_bytes) <= budget
        if use_1d:
            tm = tm_1d

    tn = None
    if not use_1d:
        # --- 2-D fallback: column-tile W2, fc1 gated behind pl.when(j==0) ---
        tn = _largest_tile_divisor(npad, tn_max)
        while _vmem_bytes_2d(tm, tn, k1p, k2p, x_bytes) > budget and (tm > 16 or tn > 128):
            if tn > 128 and (tn >= tm or tm <= 16):
                tn = _largest_tile_divisor(npad, tn // 2)
            elif tm > 16:
                tm = max(16, (tm // 2) // 16 * 16)
            else:
                break
        # TODO(synk): if W1 alone (k1p*k2p bf16) exceeds the VMEM budget we would
        # also need to tile the contraction dims; not implemented here.

    # v7x megacore: with only one row tile, one of the two TensorCores idles.
    if small_vmem and m >= 32 and _round_up(m, tm) // tm < 2:
        tm_half = max(16, _round_up((m + 1) // 2, 16))
        if tm_half < tm:                  # smaller tile always still fits
            tm = tm_half

    mpad = _round_up(m, tm)

    # --- x prep: only pad/cast in the wrapper when actually needed ----------
    if mpad != m or k1p != dim1:
        # Zero-pad rows + contraction dim (zeros keep the dots exact); cast to
        # bf16 here so the padded copy is half-width.
        x_in = _pad_to(x, (mpad, k1p), jnp.bfloat16)
    else:
        x_in = x                           # f32; kernel casts to bf16 on-chip

    flops = int(2 * mpad * (k1p * k2p + k2p * npad))

    if use_1d:
        bytes_accessed = int(x_in.size * x_in.dtype.itemsize
                             + w1_t.size * 2 + w2_t.size * 2
                             + b1_p.size * 4 + b2_p.size * 4
                             + mpad * npad * 4)
        out = pl.pallas_call(
            _pred_kernel_1d,
            out_shape=jax.ShapeDtypeStruct((mpad, npad), jnp.float32),
            grid=(mpad // tm,),
            in_specs=[
                pl.BlockSpec((tm, k1p), lambda i: (i, 0)),    # x row tile
                pl.BlockSpec((k1p, k2p), lambda i: (0, 0)),   # W1 resident
                pl.BlockSpec((1, k2p), lambda i: (0, 0)),     # b1 resident
                pl.BlockSpec((k2p, npad), lambda i: (0, 0)),  # W2 fully resident
                pl.BlockSpec((1, npad), lambda i: (0, 0)),    # b2 resident
            ],
            out_specs=pl.BlockSpec((tm, npad), lambda i: (i, 0)),
            scratch_shapes=[pltpu.VMEM((tm, k2p), jnp.bfloat16)],
            compiler_params=pltpu.CompilerParams(
                dimension_semantics=("parallel",),
                vmem_limit_bytes=vmem_limit,
            ),
            cost_estimate=pl.CostEstimate(
                flops=flops, transcendentals=0, bytes_accessed=bytes_accessed),
        )(x_in, w1_t, b1_p, w2_t, b2_p)
    else:
        n_row_tiles = mpad // tm
        bytes_accessed = int(x_in.size * x_in.dtype.itemsize
                             + w1_t.size * 2 + b1_p.size * 4
                             + n_row_tiles * (w2_t.size * 2 + b2_p.size * 4)
                             + mpad * npad * 4)
        out = pl.pallas_call(
            _pred_kernel_2d,
            out_shape=jax.ShapeDtypeStruct((mpad, npad), jnp.float32),
            grid=(mpad // tm, npad // tn),
            in_specs=[
                pl.BlockSpec((tm, k1p), lambda i, j: (i, 0)),   # x row tile
                pl.BlockSpec((k1p, k2p), lambda i, j: (0, 0)),  # W1 resident
                pl.BlockSpec((1, k2p), lambda i, j: (0, 0)),    # b1 resident
                pl.BlockSpec((k2p, tn), lambda i, j: (0, j)),   # W2 column tile
                pl.BlockSpec((1, tn), lambda i, j: (0, j)),     # b2 column tile
            ],
            out_specs=pl.BlockSpec((tm, tn), lambda i, j: (i, j)),
            scratch_shapes=[pltpu.VMEM((tm, k2p), jnp.bfloat16)],
            compiler_params=pltpu.CompilerParams(
                # j MUST be sequential ("arbitrary"): h_ref carries fc1 across j.
                dimension_semantics=("parallel", "arbitrary"),
                vmem_limit_bytes=vmem_limit,
            ),
            cost_estimate=pl.CostEstimate(
                flops=flops, transcendentals=0, bytes_accessed=bytes_accessed),
        )(x_in, w1_t, b1_p, w2_t, b2_p)

    if mpad != m or npad != n_nodes:
        out = out[:m, :n_nodes]
    # PyTorch reshape([n_nodes, n_nodes]); no-op since x is (n_nodes, dim1).
    return out.reshape(n_nodes, n_nodes)


# ----------------------------------------------------------------------------
# init helpers matching the PyTorch module
# ----------------------------------------------------------------------------
def xavier_normal(key, out_features, in_features):
    # torch.nn.init.xavier_normal_: std = sqrt(2 / (fan_in + fan_out)), gain=1
    std = jnp.sqrt(2.0 / (in_features + out_features))
    return std * jax.random.normal(key, (out_features, in_features), jnp.float32)


def linear_bias_default(key, in_features, out_features):
    # torch.nn.Linear default bias init: U(-1/sqrt(fan_in), 1/sqrt(fan_in))
    bound = 1.0 / jnp.sqrt(jnp.asarray(in_features, jnp.float32))
    return jax.random.uniform(key, (out_features,), jnp.float32, -bound, bound)


# ----------------------------------------------------------------------------
# self-test
# ----------------------------------------------------------------------------
if __name__ == "__main__":
    def make_case(key, n_nodes, dim1, dim2):
        kx, kw1, kb1, kw2, kb2 = jax.random.split(key, 5)
        x = jax.random.normal(kx, (n_nodes, dim1), jnp.float32)
        w1 = xavier_normal(kw1, dim2, dim1)          # fc1.weight: (dim2, dim1)
        b1 = linear_bias_default(kb1, dim1, dim2)    # fc1.bias:   (dim2,)
        w2 = xavier_normal(kw2, n_nodes, dim2)       # fc2.weight: (n_nodes, dim2)
        b2 = linear_bias_default(kb2, dim2, n_nodes) # fc2.bias:   (n_nodes,)
        return x, w1, b1, w2, b2

    def ref_forward(x, w1, b1, w2, b2):
        # Emulates the kernel's numerics: bf16 operands, f32 accumulation.
        n_nodes = w2.shape[0]
        h = jnp.dot(x.astype(jnp.bfloat16), w1.T.astype(jnp.bfloat16),
                    preferred_element_type=jnp.float32)
        h = jnp.maximum(h + b1, 0.0).astype(jnp.bfloat16)
        o = jnp.dot(h, w2.T.astype(jnp.bfloat16),
                    preferred_element_type=jnp.float32) + b2
        return o.reshape(n_nodes, n_nodes)

    def check(out, ref, tag):
        assert out.shape == ref.shape, (tag, out.shape, ref.shape)
        err = float(jnp.max(jnp.abs(out - ref)))
        assert jnp.allclose(out, ref, atol=2e-2, rtol=2e-2), (tag, err)

    key = jax.random.PRNGKey(0)
    k1, k2, k3 = jax.random.split(key, 3)

    # Case 1: small shapes — exercises the 1-D resident-W2 path and the 2-D path.
    x, w1, b1, w2, b2 = make_case(k1, 8, 32, 64)
    params, meta = prepare_params(w1, b1, w2, b2)
    ref = ref_forward(x, w1, b1, w2, b2)
    check(jax.block_until_ready(prediction_layer(x, params, meta)), ref, "small/1d")
    check(jax.block_until_ready(
        prediction_layer(x, params, meta, force_two_d=True)), ref, "small/2d")

    # Case 2: unaligned dims + multi-tile 2-D grid — validates the
    # pl.when(j==0) fc1-reuse carry across column tiles plus row/col padding.
    x, w1, b1, w2, b2 = make_case(k2, 200, 72, 100)
    params, meta = prepare_params(w1, b1, w2, b2)
    ref = ref_forward(x, w1, b1, w2, b2)
    check(jax.block_until_ready(prediction_layer(x, params, meta)), ref, "med/1d")
    check(jax.block_until_ready(
        prediction_layer(x, params, meta, force_two_d=True,
                         tile_override=(32, 128))), ref, "med/2d")

    # Case 3: fully tile-aligned shapes — exercises the no-pad / in-kernel-cast path.
    x, w1, b1, w2, b2 = make_case(k3, 128, 128, 128)
    params, meta = prepare_params(w1, b1, w2, b2)
    ref = ref_forward(x, w1, b1, w2, b2)
    check(jax.block_until_ready(prediction_layer(x, params, meta)), ref, "aligned/1d")

    print("KERNEL_OK")
</pallas_src>

<mosaic_0001>
module attributes {stable_mosaic.version = 11 : i64} {
  func.func @_pred_kernel_1d(%arg0: i32, %arg1: memref<16x128xbf16, #tpu.memory_space<vmem>>, %arg2: memref<128x128xbf16, #tpu.memory_space<vmem>>, %arg3: memref<1x128xf32, #tpu.memory_space<vmem>>, %arg4: memref<128x128xbf16, #tpu.memory_space<vmem>>, %arg5: memref<1x128xf32, #tpu.memory_space<vmem>>, %arg6: memref<16x128xf32, #tpu.memory_space<vmem>>, %arg7: memref<16x128xbf16, #tpu.memory_space<vmem>>) attributes {dimension_semantics = [#tpu.dimension_semantics<parallel>], iteration_bounds = array<i64: 1>, scalar_prefetch = 0 : i64, scratch_operands = 1 : i64, tpu.core_type = #tpu.core_type<tc>, window_params = [{transform_indices = @transform_0, window_bounds = array<i64: 16, 128>}, {pipeline_mode = #tpu.pipeline_mode<synchronous>, transform_indices = @transform_1, window_bounds = array<i64: 128, 128>}, {pipeline_mode = #tpu.pipeline_mode<synchronous>, transform_indices = @transform_2, window_bounds = array<i64: 1, 128>}, {pipeline_mode = #tpu.pipeline_mode<synchronous>, transform_indices = @transform_3, window_bounds = array<i64: 128, 128>}, {pipeline_mode = #tpu.pipeline_mode<synchronous>, transform_indices = @transform_4, window_bounds = array<i64: 1, 128>}, {transform_indices = @transform_5, window_bounds = array<i64: 16, 128>}]} {
    %c0 = arith.constant 0 : index
    %c0_0 = arith.constant 0 : index
    %0 = vector.load %arg1[%c0, %c0_0] : memref<16x128xbf16, #tpu.memory_space<vmem>>, vector<16x128xbf16>
    %c0_1 = arith.constant 0 : index
    %c0_2 = arith.constant 0 : index
    %1 = vector.load %arg2[%c0_1, %c0_2] : memref<128x128xbf16, #tpu.memory_space<vmem>>, vector<128x128xbf16>
    %cst = arith.constant dense<0.000000e+00> : vector<16x128xf32>
    %2 = tpu.matmul %0, %1, %cst {dimension_numbers = #tpu.dot_dimension_numbers<[1], [0], [0], [1], [0, 0, 1, 1], [], []>} : vector<16x128xbf16>, vector<128x128xbf16>, vector<16x128xf32> -> vector<16x128xf32>
    %c0_3 = arith.constant 0 : index
    %c0_4 = arith.constant 0 : index
    %3 = vector.load %arg3[%c0_3, %c0_4] : memref<1x128xf32, #tpu.memory_space<vmem>>, vector<1x128xf32>
    %4 = vector.broadcast %3 : vector<1x128xf32> to vector<16x128xf32>
    %5 = arith.addf %2, %4 : vector<16x128xf32>
    %cst_5 = arith.constant 0.000000e+00 : f32
    %6 = vector.broadcast %cst_5 : f32 to vector<16x128xf32>
    %7 = arith.maximumf %5, %6 : vector<16x128xf32>
    %8 = arith.truncf %7 : vector<16x128xf32> to vector<16x128xbf16>
    %c0_6 = arith.constant 0 : index
    %c0_7 = arith.constant 0 : index
    %9 = vector.load %arg7[%c0_6, %c0_7] : memref<16x128xbf16, #tpu.memory_space<vmem>>, vector<16x128xbf16>
    tpu.vector_store %arg7[%c0_6, %c0_7], %8 {strides = array<i32>} : memref<16x128xbf16, #tpu.memory_space<vmem>>, vector<16x128xbf16>,
    %c0_8 = arith.constant 0 : index
    %c0_9 = arith.constant 0 : index
    %10 = vector.load %arg7[%c0_8, %c0_9] : memref<16x128xbf16, #tpu.memory_space<vmem>>, vector<16x128xbf16>
    %c0_10 = arith.constant 0 : index
    %c0_11 = arith.constant 0 : index
    %11 = vector.load %arg4[%c0_10, %c0_11] : memref<128x128xbf16, #tpu.memory_space<vmem>>, vector<128x128xbf16>
    %cst_12 = arith.constant dense<0.000000e+00> : vector<16x128xf32>
    %12 = tpu.matmul %10, %11, %cst_12 {dimension_numbers = #tpu.dot_dimension_numbers<[1], [0], [0], [1], [0, 0, 1, 1], [], []>} : vector<16x128xbf16>, vector<128x128xbf16>, vector<16x128xf32> -> vector<16x128xf32>
    %c0_13 = arith.constant 0 : index
    %c0_14 = arith.constant 0 : index
    %13 = vector.load %arg5[%c0_13, %c0_14] : memref<1x128xf32, #tpu.memory_space<vmem>>, vector<1x128xf32>
    %14 = vector.broadcast %13 : vector<1x128xf32> to vector<16x128xf32>
    %15 = arith.addf %12, %14 : vector<16x128xf32>
    %c0_15 = arith.constant 0 : index
    %c0_16 = arith.constant 0 : index
    %16 = vector.load %arg6[%c0_15, %c0_16] : memref<16x128xf32, #tpu.memory_space<vmem>>, vector<16x128xf32>
    tpu.vector_store %arg6[%c0_15, %c0_16], %15 {strides = array<i32>} : memref<16x128xf32, #tpu.memory_space<vmem>>, vector<16x128xf32>,
    return
  }
  func.func @transform_0(%arg0: i32) -> (i32, i32) {
    %c0_i32 = arith.constant 0 : i32
    %c0_i32_0 = arith.constant 0 : i32
    return %arg0, %c0_i32 : i32, i32
  }
  func.func @transform_1(%arg0: i32) -> (i32, i32) {
    %c0_i32 = arith.constant 0 : i32
    %c0_i32_0 = arith.constant 0 : i32
    %c0_i32_1 = arith.constant 0 : i32
    return %c0_i32, %c0_i32_0 : i32, i32
  }
  func.func @transform_2(%arg0: i32) -> (i32, i32) {
    %c0_i32 = arith.constant 0 : i32
    %c0_i32_0 = arith.constant 0 : i32
    %c0_i32_1 = arith.constant 0 : i32
    return %c0_i32, %c0_i32_0 : i32, i32
  }
  func.func @transform_3(%arg0: i32) -> (i32, i32) {
    %c0_i32 = arith.constant 0 : i32
    %c0_i32_0 = arith.constant 0 : i32
    %c0_i32_1 = arith.constant 0 : i32
    return %c0_i32, %c0_i32_0 : i32, i32
  }
  func.func @transform_4(%arg0: i32) -> (i32, i32) {
    %c0_i32 = arith.constant 0 : i32
    %c0_i32_0 = arith.constant 0 : i32
    %c0_i32_1 = arith.constant 0 : i32
    return %c0_i32, %c0_i32_0 : i32, i32
  }
  func.func @transform_5(%arg0: i32) -> (i32, i32) {
    %c0_i32 = arith.constant 0 : i32
    %c0_i32_0 = arith.constant 0 : i32
    return %arg0, %c0_i32 : i32, i32
  }
}

</mosaic_0001>

<llo_original>
// kernel: tpu_custom_call.1
$region0: #{tpu_custom_call.1}
  #allocation0 [shape = 'u32[]', space=smem, size = 0x4, offset = 0x4, fixed_abs, tag = 'smem constant byte address 0x4 - core index']
  #allocation1 [shape = 'u32[144,128]{1,0:T(1,128)}', space=vmem, size = 0x12000, scoped, tag = 'internal scratch']
  #allocation2 [shape = 'bf16[16,128]{1,0:T(8,128)(2,1)}', space=vmem, size = 0x1000, scoped, tag = 'scratch operand']
  %s0 = inlined_call_operand.hbm [shape: bf16[16,128], index: 0, kind: input, shape index: {}]
  %s1 = inlined_call_operand.hbm [shape: bf16[128,128], index: 1, kind: input, shape index: {}]
  %s2 = inlined_call_operand.vmem [shape: f32[1,128], index: 2, kind: input, shape index: {}]
  %s3 = inlined_call_operand.hbm [shape: bf16[128,128], index: 3, kind: input, shape index: {}]
  %s4 = inlined_call_operand.vmem [shape: f32[1,128], index: 4, kind: input, shape index: {}]
  %s5 = inlined_call_operand.hbm [shape: f32[16,128], index: 5, kind: output, shape index: {}]
  %s6 = sld [smem:[#allocation0]]
  $region42: #{tpu_custom_call.1} parent=0
    _
  %s8 = ssub.s32 1, %s6
  %s9 = scalar_select 0, %s8, %s6
  $region1: #{tpu_custom_call.1} parent=0
    #allocation3 [shape = 'u8[4096]{0}', space=vmem, size = 0x1000, scoped, tag = 'input window, operand 0, single buffered']
    #allocation4 [shape = 's32[1]{0}', space=sflag, size = 0x4, scoped, tag = 'scoped memory for tpu_custom_call.1']
    #allocation5 [shape = 's32[1]{0}', space=sflag, size = 0x4, scoped, tag = 'scoped memory for tpu_custom_call.1']
    #allocation6 [shape = 'u8[32768]{0}', space=vmem, size = 0x8000, scoped, tag = 'input window, operand 1, single buffered']
    #allocation7 [shape = 's32[1]{0}', space=sflag, size = 0x4, scoped, tag = 'scoped memory for tpu_custom_call.1']
    #allocation8 [shape = 'u8[32768]{0}', space=vmem, size = 0x8000, scoped, tag = 'input window, operand 3, single buffered']
    #allocation9 [shape = 'u8[8192]{0}', space=vmem, size = 0x2000, scoped, tag = 'output window, operand 0, single buffered']
    %10 = vsyncpa [#allocation4], 0
    %11 = vsyncpa [#allocation7], 0
    %12 = vsyncpa [#allocation5], 0
    // Predicated region
    $region2: #{tpu_custom_call.1} parent=1 // pred_check
      _
    $region3: #{tpu_custom_call.1} parent=1 // pred_check_branch
      %14 = sbr.rel (0) target = $region5
    $region4: #{tpu_custom_call.1} parent=1 // pred_region
      %s16 = ssub.s32 128, 128
      %17 = vsyncadd [#allocation4], %s16
      %s18 = sshll.u32 [#allocation3], 4
      %s19 = int_to_ptr.vmem [resolvable:$true] %s18
      %24 = dma.hbm_to_vmem [thread:$0]  %s0, 128, %s19, [#allocation4], 64, 64, 4
    $region5: #{tpu_custom_call.1} parent=1 // pred_fallthru
      _
    // Predicated region
    $region6: #{tpu_custom_call.1} parent=1 // pred_check
      _
    $region7: #{tpu_custom_call.1} parent=1 // pred_check_branch
      %26 = sbr.rel (0) target = $region9
    $region8: #{tpu_custom_call.1} parent=1 // pred_region
      %s28 = ssub.s32 1024, 1024
      %29 = vsyncadd [#allocation7], %s28
      %s30 = sshll.u32 [#allocation6], 4
      %s31 = int_to_ptr.vmem [resolvable:$true] %s30
      %36 = dma.hbm_to_vmem [thread:$0]  %s1, 1024, %s31, [#allocation7], 64, 64, 4
    $region9: #{tpu_custom_call.1} parent=1 // pred_fallthru
      _
    // Predicated region
    $region10: #{tpu_custom_call.1} parent=1 // pred_check
      _
    $region11: #{tpu_custom_call.1} parent=1 // pred_check_branch
      %38 = sbr.rel (0) target = $region13
    $region12: #{tpu_custom_call.1} parent=1 // pred_region
      _
    $region13: #{tpu_custom_call.1} parent=1 // pred_fallthru
      _
    // Predicated region
    $region14: #{tpu_custom_call.1} parent=1 // pred_check
      _
    $region15: #{tpu_custom_call.1} parent=1 // pred_check_branch
      %40 = sbr.rel (0) target = $region17
    $region16: #{tpu_custom_call.1} parent=1 // pred_region
      %s42 = ssub.s32 1024, 1024
      %43 = vsyncadd [#allocation7], %s42
      %s44 = sshll.u32 [#allocation8], 4
      %s45 = int_to_ptr.vmem [resolvable:$true] %s44
      %50 = dma.hbm_to_vmem [thread:$0]  %s3, 1024, %s45, [#allocation7], 64, 64, 4
    $region17: #{tpu_custom_call.1} parent=1 // pred_fallthru
      _
    // Predicated region
    $region18: #{tpu_custom_call.1} parent=1 // pred_check
      _
    $region19: #{tpu_custom_call.1} parent=1 // pred_check_branch
      %52 = sbr.rel (0) target = $region21
    $region20: #{tpu_custom_call.1} parent=1 // pred_region
      _
    $region21: #{tpu_custom_call.1} parent=1 // pred_fallthru
      _
    // Predicated region
    $region22: #{tpu_custom_call.1} parent=1 // pred_check
      _
    $region23: #{tpu_custom_call.1} parent=1 // pred_check_branch
      %54 = sbr.rel (0) target = $region25
    $region24: #{tpu_custom_call.1} parent=1 // pred_region
      %55 = dma.done [#allocation4], 128
    $region25: #{tpu_custom_call.1} parent=1 // pred_fallthru
      _
    // Predicated region
    $region26: #{tpu_custom_call.1} parent=1 // pred_check
      _
    $region27: #{tpu_custom_call.1} parent=1 // pred_check_branch
      %57 = sbr.rel (0) target = $region29
    $region28: #{tpu_custom_call.1} parent=1 // pred_region
      %58 = dma.done [#allocation7], 1024
    $region29: #{tpu_custom_call.1} parent=1 // pred_fallthru
      _
    // Predicated region
    $region30: #{tpu_custom_call.1} parent=1 // pred_check
      _
    $region31: #{tpu_custom_call.1} parent=1 // pred_check_branch
      %60 = sbr.rel (0) target = $region33
    $region32: #{tpu_custom_call.1} parent=1 // pred_region
      %61 = dma.done [#allocation7], 1024
    $region33: #{tpu_custom_call.1} parent=1 // pred_fallthru
      _
    %v63 = vld [vmem:[#allocation3] sm:$0xf]
    %v64 = vld [vmem:[#allocation3 + $0x4] sm:$0xf]
    %v65 = vld [vmem:[#allocation6] sm:$0xf]
    %v66 = vld [vmem:[#allocation6 + $0x4] sm:$0xf]
    %v67 = vld [vmem:[#allocation6 + $0x8] sm:$0xf]
    %v68 = vld [vmem:[#allocation6 + $0xc] sm:$0xf]
    %v69 = vld [vmem:[#allocation6 + $0x10] sm:$0xf]
    %v70 = vld [vmem:[#allocation6 + $0x14] sm:$0xf]
    %v71 = vld [vmem:[#allocation6 + $0x18] sm:$0xf]
    %v72 = vld [vmem:[#allocation6 + $0x1c] sm:$0xf]
    %v73 = vld [vmem:[#allocation6 + $0x20] sm:$0xf]
    %v74 = vld [vmem:[#allocation6 + $0x24] sm:$0xf]
    %v75 = vld [vmem:[#allocation6 + $0x28] sm:$0xf]
    %v76 = vld [vmem:[#allocation6 + $0x2c] sm:$0xf]
    %v77 = vld [vmem:[#allocation6 + $0x30] sm:$0xf]
    %v78 = vld [vmem:[#allocation6 + $0x34] sm:$0xf]
    %v79 = vld [vmem:[#allocation6 + $0x38] sm:$0xf]
    %v80 = vld [vmem:[#allocation6 + $0x3c] sm:$0xf]
    %v81 = vld [vmem:[%s2] sm:$0x1]
    %v83 = vlaneseq
    %v84 = vshrl.u32 %v83, 7
    %v85 = vsub.s32 0, %v84
    %v86 = vrot.slane %v81, %v85
    %v90 = vunpack.c.l.b16 %v63
    %v91 = vunpack.c.l.b16 %v64
    %v92 = vpack.c.b16 %v91, %v90
    %v110 = vunpack.c.l.b16 %v65
    %v111 = vunpack.c.l.b16 %v66
    %v112 = vunpack.c.l.b16 %v67
    %v113 = vunpack.c.l.b16 %v68
    %v114 = vunpack.c.l.b16 %v69
    %v115 = vunpack.c.l.b16 %v70
    %v116 = vunpack.c.l.b16 %v71
    %v117 = vunpack.c.l.b16 %v72
    %v118 = vunpack.c.l.b16 %v73
    %v119 = vunpack.c.l.b16 %v74
    %v120 = vunpack.c.l.b16 %v75
    %v121 = vunpack.c.l.b16 %v76
    %v122 = vunpack.c.l.b16 %v77
    %v123 = vunpack.c.l.b16 %v78
    %v124 = vunpack.c.l.b16 %v79
    %v125 = vunpack.c.l.b16 %v80
    %v126 = vpack.c.b16 %v111, %v110
    %v127 = vpack.c.b16 %v113, %v112
    %v128 = vpack.c.b16 %v115, %v114
    %v129 = vpack.c.b16 %v117, %v116
    %v130 = vpack.c.b16 %v119, %v118
    %v131 = vpack.c.b16 %v121, %v120
    %v132 = vpack.c.b16 %v123, %v122
    %v133 = vpack.c.b16 %v125, %v124
    %142 = vmatprep.subr.bf16.mxu0 0
    %143 = vmatpush1.bf16.msra.mxu0 %v133
    %144 = vmatprep.subr.bf16.mxu0 0
    %145 = vmatpush1.bf16.msra.mxu0 %v132
    %146 = vmatprep.subr.bf16.mxu0 0
    %147 = vmatpush1.bf16.msra.mxu0 %v131
    %148 = vmatprep.subr.bf16.mxu0 0
    %149 = vmatpush1.bf16.msra.mxu0 %v130
    %150 = vmatprep.subr.bf16.mxu0 0
    %151 = vmatpush1.bf16.msra.mxu0 %v129
    %152 = vmatprep.subr.bf16.mxu0 0
    %153 = vmatpush1.bf16.msra.mxu0 %v128
    %154 = vmatprep.subr.bf16.mxu0 0
    %155 = vmatpush1.bf16.msra.mxu0 %v127
    %156 = vmatprep.subr.bf16.mxu0 0
    %157 = vmatpush1.bf16.msra.mxu0 %v126
    %158 = vmatprep.subr.bf16.mxu0 0
    %159 = vmatpush2.bf16.msra.mxu0 0
    %160 = vmatprep.subr.bf16.mxu0 0
    %161 = vmatpush2.bf16.msra.mxu0 0
    %162 = vmatprep.subr.bf16.mxu0 0
    %163 = vmatpush2.bf16.msra.mxu0 0
    %164 = vmatprep.subr.bf16.mxu0 0
    %165 = vmatpush2.bf16.msra.mxu0 0
    %166 = vmatprep.subr.bf16.mxu0 0
    %167 = vmatpush2.bf16.msra.mxu0 0
    %168 = vmatprep.subr.bf16.mxu0 0
    %169 = vmatpush2.bf16.msra.mxu0 0
    %170 = vmatprep.subr.bf16.mxu0 0
    %171 = vmatpush2.bf16.msra.mxu0 0
    %172 = vmatprep.subr.bf16.mxu0 0
    %173 = vmatpush2.bf16.msra.mxu0 0
    %174 = vmatprep.mubr.bf16.mxu0 0
    %175 = vmatmul.mubr.bf16.gmra.mxu0 %v92
    %v176 = vpop.f32.mrf.mxu0
    %v177 = vadd.f32 %v86, %v176
    %v178 = vpop.f32.mrf.mxu0
    %v179 = vpop.f32.mrf.mxu0
    %v180 = vadd.f32 %v86, %v179
    %v181 = vpop.f32.mrf.mxu0
    %182 = vdwg.mxu0
    %v183 = vmax.f32 %v177, 0.0
    %v184 = vmax.f32 %v180, 0.0
    %v185 = vpack.c.bf16 %v184, %v183
    %v187 = vunpack.c.l.b16 %v185
    %v188 = vunpack.c.h.b16 %v185
    %v189 = vpack.c.b16 %v187, %v187
    %v190 = vpack.c.b16 %v188, %v188
    %193 = vst [vmem:[#allocation2] sm:$0xf] %v189
    %194 = vst [vmem:[#allocation2 + $0x4] sm:$0xf] %v190
    %v195 = vld [vmem:[#allocation2] sm:$0xf]
    %v196 = vld [vmem:[#allocation2 + $0x4] sm:$0xf]
    %v197 = vld [vmem:[#allocation8] sm:$0xf]
    %v198 = vld [vmem:[#allocation8 + $0x4] sm:$0xf]
    %v199 = vld [vmem:[#allocation8 + $0x8] sm:$0xf]
    %v200 = vld [vmem:[#allocation8 + $0xc] sm:$0xf]
    %v201 = vld [vmem:[#allocation8 + $0x10] sm:$0xf]
    %v202 = vld [vmem:[#allocation8 + $0x14] sm:$0xf]
    %v203 = vld [vmem:[#allocation8 + $0x18] sm:$0xf]
    %v204 = vld [vmem:[#allocation8 + $0x1c] sm:$0xf]
    %v205 = vld [vmem:[#allocation8 + $0x20] sm:$0xf]
    %v206 = vld [vmem:[#allocation8 + $0x24] sm:$0xf]
    %v207 = vld [vmem:[#allocation8 + $0x28] sm:$0xf]
    %v208 = vld [vmem:[#allocation8 + $0x2c] sm:$0xf]
    %v209 = vld [vmem:[#allocation8 + $0x30] sm:$0xf]
    %v210 = vld [vmem:[#allocation8 + $0x34] sm:$0xf]
    %v211 = vld [vmem:[#allocation8 + $0x38] sm:$0xf]
    %v212 = vld [vmem:[#allocation8 + $0x3c] sm:$0xf]
    %v213 = vld [vmem:[%s4] sm:$0x1]
    %v215 = vlaneseq
    %v216 = vshrl.u32 %v215, 7
    %v217 = vsub.s32 0, %v216
    %v218 = vrot.slane %v213, %v217
    %v222 = vunpack.c.l.b16 %v195
    %v223 = vunpack.c.l.b16 %v196
    %v224 = vpack.c.b16 %v223, %v222
    %v242 = vunpack.c.l.b16 %v197
    %v243 = vunpack.c.l.b16 %v198
    %v244 = vunpack.c.l.b16 %v199
    %v245 = vunpack.c.l.b16 %v200
    %v246 = vunpack.c.l.b16 %v201
    %v247 = vunpack.c.l.b16 %v202
    %v248 = vunpack.c.l.b16 %v203
    %v249 = vunpack.c.l.b16 %v204
    %v250 = vunpack.c.l.b16 %v205
    %v251 = vunpack.c.l.b16 %v206
    %v252 = vunpack.c.l.b16 %v207
    %v253 = vunpack.c.l.b16 %v208
    %v254 = vunpack.c.l.b16 %v209
    %v255 = vunpack.c.l.b16 %v210
    %v256 = vunpack.c.l.b16 %v211
    %v257 = vunpack.c.l.b16 %v212
    %v258 = vpack.c.b16 %v243, %v242
    %v259 = vpack.c.b16 %v245, %v244
    %v260 = vpack.c.b16 %v247, %v246
    %v261 = vpack.c.b16 %v249, %v248
    %v262 = vpack.c.b16 %v251, %v250
    %v263 = vpack.c.b16 %v253, %v252
    %v264 = vpack.c.b16 %v255, %v254
    %v265 = vpack.c.b16 %v257, %v256
    %274 = vmatprep.subr.bf16.mxu0 0
    %275 = vmatpush1.bf16.msra.mxu0 %v265
    %276 = vmatprep.subr.bf16.mxu0 0
    %277 = vmatpush1.bf16.msra.mxu0 %v264
    %278 = vmatprep.subr.bf16.mxu0 0
    %279 = vmatpush1.bf16.msra.mxu0 %v263
    %280 = vmatprep.subr.bf16.mxu0 0
    %281 = vmatpush1.bf16.msra.mxu0 %v262
    %282 = vmatprep.subr.bf16.mxu0 0
    %283 = vmatpush1.bf16.msra.mxu0 %v261
    %284 = vmatprep.subr.bf16.mxu0 0
    %285 = vmatpush1.bf16.msra.mxu0 %v260
    %286 = vmatprep.subr.bf16.mxu0 0
    %287 = vmatpush1.bf16.msra.mxu0 %v259
    %288 = vmatprep.subr.bf16.mxu0 0
    %289 = vmatpush1.bf16.msra.mxu0 %v258
    %290 = vmatprep.subr.bf16.mxu0 0
    %291 = vmatpush2.bf16.msra.mxu0 0
    %292 = vmatprep.subr.bf16.mxu0 0
    %293 = vmatpush2.bf16.msra.mxu0 0
    %294 = vmatprep.subr.bf16.mxu0 0
    %295 = vmatpush2.bf16.msra.mxu0 0
    %296 = vmatprep.subr.bf16.mxu0 0
    %297 = vmatpush2.bf16.msra.mxu0 0
    %298 = vmatprep.subr.bf16.mxu0 0
    %299 = vmatpush2.bf16.msra.mxu0 0
    %300 = vmatprep.subr.bf16.mxu0 0
    %301 = vmatpush2.bf16.msra.mxu0 0
    %302 = vmatprep.subr.bf16.mxu0 0
    %303 = vmatpush2.bf16.msra.mxu0 0
    %304 = vmatprep.subr.bf16.mxu0 0
    %305 = vmatpush2.bf16.msra.mxu0 0
    %306 = vmatprep.mubr.bf16.mxu0 0
    %307 = vmatmul.mubr.bf16.gmra.mxu0 %v224
    %v308 = vpop.f32.mrf.mxu0
    %v309 = vadd.f32 %v218, %v308
    %v310 = vpop.f32.mrf.mxu0
    %v311 = vpop.f32.mrf.mxu0
    %v312 = vadd.f32 %v218, %v311
    %v313 = vpop.f32.mrf.mxu0
    %314 = vdwg.mxu0
    %315 = vst [vmem:[#allocation9] sm:$0xff] %v309
    %316 = vst [vmem:[#allocation9 + $0x8] sm:$0xff] %v312
    // Predicated region
    $region34: #{tpu_custom_call.1} parent=1 // pred_check
      _
    $region35: #{tpu_custom_call.1} parent=1 // pred_check_branch
      %318 = sbr.rel (0) target = $region37
    $region36: #{tpu_custom_call.1} parent=1 // pred_region
      %s320 = ssub.s32 256, 256
      %321 = vsyncadd [#allocation5], %s320
      %s322 = sshll.u32 [#allocation9], 4
      %s323 = int_to_ptr.vmem [resolvable:$true] %s322
      %328 = dma.vmem_to_hbm [thread:$0]  %s323, 256, %s5, [#allocation5], 128, 128, 8
    $region37: #{tpu_custom_call.1} parent=1 // pred_fallthru
      _
    // Predicated region
    $region38: #{tpu_custom_call.1} parent=1 // pred_check
      _
    $region39: #{tpu_custom_call.1} parent=1 // pred_check_branch
      %330 = sbr.rel (0) target = $region41
    $region40: #{tpu_custom_call.1} parent=1 // pred_region
      %331 = dma.done [#allocation5], 256
    $region41: #{tpu_custom_call.1} parent=1 // pred_fallthru
      _
    %332 = vsyncpa [#allocation4], 1
    %333 = vsyncpa [#allocation7], 1
    %334 = vsyncpa [#allocation5], 1

</llo_original>
